<compile_context>
chip_gen: v6e
topology: v6e:2x2x1
jax: 0.10.0
libtpu: 0.0.40
codegen_flags: <defaults>
</compile_context>

<pallas_src>
import math

import jax
import jax.numpy as jnp
from jax.experimental import pallas as pl
from jax.experimental.pallas import tpu as pltpu  # noqa: F401  (TPU backend)

# ---- small shapes consistent with the module / tutorial convention ----
S = 8          # sequence length
N = 2          # batch
D_MODEL = 32   # d_model
MAX_LEN = 5000 # size of the registered pe buffer (as in the module)
DROPOUT_P = 0.2  # module's dropout prob (identity here — see TODO in kernel)


# ------------------------- module "init" (register_buffer) -------------------------

def make_pe_table(d_model: int, max_len: int = MAX_LEN) -> jnp.ndarray:
    """Builds the positional-encoding buffer exactly like the PyTorch module.

    Returns shape (max_len, 1, d_model), matching pe.unsqueeze(0).transpose(0, 1).
    Computed once at init (shape-only constant), NOT inside the traced forward.
    """
    position = jnp.arange(max_len, dtype=jnp.float32)[:, None]
    div_term = jnp.exp(jnp.arange(0, d_model, 2, dtype=jnp.float32)
                       * (-math.log(10000.0) / d_model))
    pe = jnp.zeros((max_len, d_model), jnp.float32)
    pe = pe.at[:, 0::2].set(jnp.sin(position * div_term))
    pe = pe.at[:, 1::2].set(jnp.cos(position * div_term))
    return pe[:, None, :]  # (max_len, 1, d_model)


# ------------------------- Pallas kernel -------------------------

def _pos_enc_kernel(x_ref, pe_ref, o_ref):
    # x_ref/o_ref: (S, N, D) full block in VMEM; pe_ref: (S, 1, D).
    # Broadcast over the batch axis + add are pure VPU work on resident vregs.
    o_ref[...] = x_ref[...] + pe_ref[...]
    # TODO(synk): nn.Dropout(p=0.2) is treated as identity (eval/inference
    # semantics); training-mode dropout would need pltpu PRNG + a seed input.


def positional_encoding(x: jnp.ndarray, pe_table: jnp.ndarray) -> jnp.ndarray:
    """x: (S, N, d_model) float32; pe_table: (max_len, 1, d_model) buffer."""
    s, n, d = x.shape
    return pl.pallas_call(
        _pos_enc_kernel,
        out_shape=jax.ShapeDtypeStruct((s, n, d), x.dtype),
        grid=(1,),  # single grid step: whole forward fused, no per-step overhead
        in_specs=[
            pl.BlockSpec((s, n, d), lambda i: (0, 0, 0)),   # full activation block
            # Only the first `s` rows of the (max_len, 1, d) buffer are DMA'd:
            pl.BlockSpec((s, 1, d), lambda i: (0, 0, 0)),
        ],
        out_specs=pl.BlockSpec((s, n, d), lambda i: (0, 0, 0)),
    )(x, pe_table)


# ------------------------- demo / self-check -------------------------

if __name__ == "__main__":
    key = jax.random.PRNGKey(0)
    x = jax.random.normal(key, (S, N, D_MODEL), dtype=jnp.float32)

    pe_table = make_pe_table(D_MODEL)            # module init (register_buffer)

    fwd = jax.jit(positional_encoding)
    out = fwd(x, pe_table)
    jax.block_until_ready(out)

    # Pure-JAX reference of the module's forward (dropout = identity).
    ref = x + pe_table[:S]

    assert out.shape == (S, N, D_MODEL)
    assert bool(jnp.allclose(out, ref, atol=1e-6, rtol=1e-6)), "mismatch vs reference"
    print("KERNEL_OK")
</pallas_src>

<mosaic_0001>
module attributes {stable_mosaic.version = 11 : i64} {
  func.func @_pos_enc_kernel(%arg0: i32, %arg1: memref<8x2x32xf32, #tpu.memory_space<vmem>>, %arg2: memref<8x1x32xf32, #tpu.memory_space<vmem>>, %arg3: memref<8x2x32xf32, #tpu.memory_space<vmem>>) attributes {dimension_semantics = [#tpu.dimension_semantics<arbitrary>], iteration_bounds = array<i64: 1>, scalar_prefetch = 0 : i64, scratch_operands = 0 : i64, tpu.core_type = #tpu.core_type<tc>, window_params = [{pipeline_mode = #tpu.pipeline_mode<synchronous>, transform_indices = @transform_0, window_bounds = array<i64: 8, 2, 32>}, {transform_indices = @transform_1, window_bounds = array<i64: 8, 1, 32>}, {pipeline_mode = #tpu.pipeline_mode<synchronous>, transform_indices = @transform_2, window_bounds = array<i64: 8, 2, 32>}]} {
    %c0 = arith.constant 0 : index
    %c0_0 = arith.constant 0 : index
    %c0_1 = arith.constant 0 : index
    %0 = vector.load %arg1[%c0, %c0_0, %c0_1] : memref<8x2x32xf32, #tpu.memory_space<vmem>>, vector<8x2x32xf32>
    %c0_2 = arith.constant 0 : index
    %c0_3 = arith.constant 0 : index
    %c0_4 = arith.constant 0 : index
    %1 = vector.load %arg2[%c0_2, %c0_3, %c0_4] : memref<8x1x32xf32, #tpu.memory_space<vmem>>, vector<8x1x32xf32>
    %2 = vector.broadcast %1 : vector<8x1x32xf32> to vector<8x2x32xf32>
    %3 = arith.addf %0, %2 : vector<8x2x32xf32>
    %c0_5 = arith.constant 0 : index
    %c0_6 = arith.constant 0 : index
    %c0_7 = arith.constant 0 : index
    %4 = vector.load %arg3[%c0_5, %c0_6, %c0_7] : memref<8x2x32xf32, #tpu.memory_space<vmem>>, vector<8x2x32xf32>
    tpu.vector_store %arg3[%c0_5, %c0_6, %c0_7], %3 {strides = array<i32>} : memref<8x2x32xf32, #tpu.memory_space<vmem>>, vector<8x2x32xf32>,
    return
  }
  func.func @transform_0(%arg0: i32) -> (i32, i32, i32) {
    %c0_i32 = arith.constant 0 : i32
    %c0_i32_0 = arith.constant 0 : i32
    %c0_i32_1 = arith.constant 0 : i32
    %c0_i32_2 = arith.constant 0 : i32
    return %c0_i32, %c0_i32_0, %c0_i32_1 : i32, i32, i32
  }
  func.func @transform_1(%arg0: i32) -> (i32, i32, i32) {
    %c0_i32 = arith.constant 0 : i32
    %c0_i32_0 = arith.constant 0 : i32
    %c0_i32_1 = arith.constant 0 : i32
    %c0_i32_2 = arith.constant 0 : i32
    return %c0_i32, %c0_i32_0, %c0_i32_1 : i32, i32, i32
  }
  func.func @transform_2(%arg0: i32) -> (i32, i32, i32) {
    %c0_i32 = arith.constant 0 : i32
    %c0_i32_0 = arith.constant 0 : i32
    %c0_i32_1 = arith.constant 0 : i32
    %c0_i32_2 = arith.constant 0 : i32
    return %c0_i32, %c0_i32_0, %c0_i32_1 : i32, i32, i32
  }
}

</mosaic_0001>

<llo_original>
// kernel: positional_encoding.1
$region0: #{positional_encoding.1}
  #allocation0 [shape = 'u32[]', space=smem, size = 0x4, offset = 0x4, fixed_abs, tag = 'smem constant byte address 0x4 - core index']
  #allocation1 [shape = 'u32[144,128]{1,0:T(1,128)}', space=vmem, size = 0x12000, scoped, tag = 'internal scratch']
  %s0 = inlined_call_operand.vmem [shape: f32[8,2,32], index: 0, kind: input, shape index: {}]
  %s1 = inlined_call_operand.vmem [shape: f32[5000,1,32], index: 1, kind: input, shape index: {}]
  %s2 = inlined_call_operand.hbm [shape: f32[8,2,32], index: 2, kind: output, shape index: {}]
  %s3 = sld [smem:[#allocation0]]
  $region18: #{positional_encoding.1} parent=0
    _
  %s5 = ssub.s32 1, %s3
  %s6 = scalar_select 0, %s5, %s3
  $region1: #{positional_encoding.1} parent=0
    #allocation2 [shape = 'u8[8192]{0}', space=vmem, size = 0x2000, scoped, tag = 'output window, operand 0, single buffered']
    #allocation3 [shape = 's32[1]{0}', space=sflag, size = 0x4, scoped, tag = 'scoped memory for positional_encoding.1']
    %7 = vsyncpa [#allocation3], 0
    // Predicated region
    $region2: #{positional_encoding.1} parent=1 // pred_check
      _
    $region3: #{positional_encoding.1} parent=1 // pred_check_branch
      %9 = sbr.rel (0) target = $region5
    $region4: #{positional_encoding.1} parent=1 // pred_region
      _
    $region5: #{positional_encoding.1} parent=1 // pred_fallthru
      _
    // Predicated region
    $region6: #{positional_encoding.1} parent=1 // pred_check
      _
    $region7: #{positional_encoding.1} parent=1 // pred_check_branch
      %11 = sbr.rel (0) target = $region9
    $region8: #{positional_encoding.1} parent=1 // pred_region
      _
    $region9: #{positional_encoding.1} parent=1 // pred_fallthru
      _
    %v12 = vld [vmem:[%s0] sm:$0x3]
    %v13 = vld [vmem:[%s0 + $0x2] sm:$0x3]
    %v14 = vld [vmem:[%s0 + $0x4] sm:$0x3]
    %v15 = vld [vmem:[%s0 + $0x6] sm:$0x3]
    %v16 = vld [vmem:[%s0 + $0x8] sm:$0x3]
    %v17 = vld [vmem:[%s0 + $0xa] sm:$0x3]
    %v18 = vld [vmem:[%s0 + $0xc] sm:$0x3]
    %v19 = vld [vmem:[%s0 + $0xe] sm:$0x3]
    %v20 = vld [vmem:[%s1] sm:$0x1]
    %v21 = vld [vmem:[%s1 + $0x1] sm:$0x1]
    %v22 = vld [vmem:[%s1 + $0x2] sm:$0x1]
    %v23 = vld [vmem:[%s1 + $0x3] sm:$0x1]
    %v24 = vld [vmem:[%s1 + $0x4] sm:$0x1]
    %v25 = vld [vmem:[%s1 + $0x5] sm:$0x1]
    %v26 = vld [vmem:[%s1 + $0x6] sm:$0x1]
    %v27 = vld [vmem:[%s1 + $0x7] sm:$0x1]
    %v36 = vlaneseq
    %v37 = vshrl.u32 %v36, 7
    %v38 = vsub.s32 0, %v37
    %v39 = vrot.slane %v20, %v38
    %v40 = vlaneseq
    %v41 = vshrl.u32 %v40, 7
    %v42 = vsub.s32 0, %v41
    %v43 = vrot.slane %v21, %v42
    %v44 = vlaneseq
    %v45 = vshrl.u32 %v44, 7
    %v46 = vsub.s32 0, %v45
    %v47 = vrot.slane %v22, %v46
    %v48 = vlaneseq
    %v49 = vshrl.u32 %v48, 7
    %v50 = vsub.s32 0, %v49
    %v51 = vrot.slane %v23, %v50
    %v52 = vlaneseq
    %v53 = vshrl.u32 %v52, 7
    %v54 = vsub.s32 0, %v53
    %v55 = vrot.slane %v24, %v54
    %v56 = vlaneseq
    %v57 = vshrl.u32 %v56, 7
    %v58 = vsub.s32 0, %v57
    %v59 = vrot.slane %v25, %v58
    %v60 = vlaneseq
    %v61 = vshrl.u32 %v60, 7
    %v62 = vsub.s32 0, %v61
    %v63 = vrot.slane %v26, %v62
    %v64 = vlaneseq
    %v65 = vshrl.u32 %v64, 7
    %v66 = vsub.s32 0, %v65
    %v67 = vrot.slane %v27, %v66
    %v76 = vadd.f32 %v12, %v39
    %v77 = vadd.f32 %v13, %v43
    %v78 = vadd.f32 %v14, %v47
    %v79 = vadd.f32 %v15, %v51
    %v80 = vadd.f32 %v16, %v55
    %v81 = vadd.f32 %v17, %v59
    %v82 = vadd.f32 %v18, %v63
    %v83 = vadd.f32 %v19, %v67
    %vm84 = vcmask 254976
    %85 = vst.msk [vmem:[#allocation2] sm:$0x3] %vm84, %v76
    %86 = vst.msk [vmem:[#allocation2 + $0x2] sm:$0x3] %vm84, %v77
    %87 = vst.msk [vmem:[#allocation2 + $0x4] sm:$0x3] %vm84, %v78
    %88 = vst.msk [vmem:[#allocation2 + $0x6] sm:$0x3] %vm84, %v79
    %89 = vst.msk [vmem:[#allocation2 + $0x8] sm:$0x3] %vm84, %v80
    %90 = vst.msk [vmem:[#allocation2 + $0xa] sm:$0x3] %vm84, %v81
    %91 = vst.msk [vmem:[#allocation2 + $0xc] sm:$0x3] %vm84, %v82
    %92 = vst.msk [vmem:[#allocation2 + $0xe] sm:$0x3] %vm84, %v83
    // Predicated region
    $region10: #{positional_encoding.1} parent=1 // pred_check
      _
    $region11: #{positional_encoding.1} parent=1 // pred_check_branch
      %94 = sbr.rel (0) target = $region13
    $region12: #{positional_encoding.1} parent=1 // pred_region
      %s96 = ssub.s32 256, 256
      %97 = vsyncadd [#allocation3], %s96
      %s98 = sshll.u32 [#allocation2], 4
      %s99 = int_to_ptr.vmem [resolvable:$true] %s98
      %104 = dma.vmem_to_hbm [thread:$0]  %s99, 256, %s2, [#allocation3], 32, 32, 2
    $region13: #{positional_encoding.1} parent=1 // pred_fallthru
      _
    // Predicated region
    $region14: #{positional_encoding.1} parent=1 // pred_check
      _
    $region15: #{positional_encoding.1} parent=1 // pred_check_branch
      %106 = sbr.rel (0) target = $region17
    $region16: #{positional_encoding.1} parent=1 // pred_region
      %107 = dma.done [#allocation3], 256
    $region17: #{positional_encoding.1} parent=1 // pred_fallthru
      _
    %108 = vsyncpa [#allocation3], 1

</llo_original>
